<compile_context>
chip_gen: v7x
topology: tpu7x:2x2x1
jax: 0.10.0
libtpu: 0.0.40
codegen_flags: <defaults>
</compile_context>

<pallas_src>
import functools

import jax
import jax.numpy as jnp
from jax.experimental import pallas as pl
from jax.experimental.pallas import tpu as pltpu

SIGMOID_TAU = 0.3
INV_TAU = 1.0 / SIGMOID_TAU
EPSILON = 1e-6
_LANES = 128
# ~2 MiB per input per pipeline buffer -> 2 inputs x 2 buffers ~= 8 MiB VMEM,
# comfortably under the default scoped-VMEM limit on v5e/v6e/v7x.
_TARGET_TILE_BYTES = 2 * 1024 * 1024


def _dice_sums_kernel(x_ref, t_ref, inter_ref, sp_ref, st_ref,
                      inter_acc, sp_acc, st_acc,
                      *, n_rows, racc, groups, mask_rows):
    """Grid = (N, num_row_blocks).

    Each step consumes one (1, C, R, 128) tile of logits/targets, accumulates
    lane-resident per-channel partial sums; the last row-block reduces the
    accumulators and writes per-batch (1, C, 1) sums.
    """
    j = pl.program_id(1)

    @pl.when(j == 0)
    def _init():
        inter_acc[...] = jnp.zeros_like(inter_acc)
        sp_acc[...] = jnp.zeros_like(sp_acc)
        st_acc[...] = jnp.zeros_like(st_acc)

    x = x_ref[0].astype(jnp.float32)      # (C, R, 128)
    t = t_ref[0].astype(jnp.float32)      # target cast in-kernel (may be bf16/int8)

    # Sigmoid with temperature: one VPU mul (precomputed 1/tau) + EUP logistic.
    p = jax.nn.sigmoid(x * INV_TAU)

    if mask_rows:
        # The last row-block can extend past n_rows; zero the invalid rows so
        # they contribute nothing to any of the three sums.
        block_rows = x.shape[1]
        row = jax.lax.broadcasted_iota(jnp.int32, x.shape, 1)
        valid = (j * block_rows + row) < n_rows
        p = jnp.where(valid, p, 0.0)
        t = jnp.where(valid, t, 0.0)

    c = x.shape[0]

    def _accumulate(acc_ref, v):
        # v: (C, R, 128) with R = groups * racc.  Folding the row-groups is a
        # vreg-tile-aligned sum (pure VPU adds, no cross-lane/XLU work here).
        if groups > 1:
            v = v.reshape(c, groups, racc, _LANES).sum(axis=1)
        acc_ref[...] += v

    _accumulate(inter_acc, p * t)
    _accumulate(sp_acc, p * p)
    _accumulate(st_acc, t * t)

    @pl.when(j == pl.num_programs(1) - 1)
    def _finalize():
        def _total(acc_ref):
            s = jnp.sum(acc_ref[...], axis=1)            # (C, 128)
            return jnp.sum(s, axis=-1, keepdims=True)    # (C, 1)

        inter_ref[...] = _total(inter_acc)[None]
        sp_ref[...] = _total(sp_acc)[None]
        st_ref[...] = _total(st_acc)[None]


def _choose_block_rows(n_rows, c, itemsize):
    """Rows (of 128 lanes) per channel per grid step."""
    if n_rows <= 8:
        return n_rows
    r = _TARGET_TILE_BYTES // (c * _LANES * itemsize)
    r = max(8, (r // 8) * 8)
    return min(r, (n_rows // 8) * 8)


def _per_batch_channel_sums(x, t, block_rows, racc, groups, n_rows, mask_rows):
    """x, t: (N, C, n_rows, 128). Returns per-batch (N, C) inter / sum(p^2) / sum(t^2)."""
    n, c = x.shape[0], x.shape[1]
    num_j = -(-n_rows // block_rows)

    kernel = functools.partial(
        _dice_sums_kernel,
        n_rows=n_rows, racc=racc, groups=groups, mask_rows=mask_rows)

    out_sd = jax.ShapeDtypeStruct((n, c, 1), jnp.float32)
    out_spec = pl.BlockSpec((1, c, 1), lambda i, j: (i, 0, 0))
    in_spec = pl.BlockSpec((1, c, block_rows, _LANES), lambda i, j: (i, 0, j, 0))

    inter, sp, st = pl.pallas_call(
        kernel,
        out_shape=(out_sd, out_sd, out_sd),
        grid_spec=pltpu.PrefetchScalarGridSpec(
            num_scalar_prefetch=0,
            grid=(n, num_j),
            in_specs=[in_spec, in_spec],
            out_specs=(out_spec, out_spec, out_spec),
            scratch_shapes=[
                pltpu.VMEM((c, racc, _LANES), jnp.float32) for _ in range(3)
            ],
        ),
        compiler_params=pltpu.CompilerParams(
            dimension_semantics=("parallel", "arbitrary")),
    )(x, t)
    return inter[:, :, 0], sp[:, :, 0], st[:, :, 0]


def dice_loss(logits, target, *, weight=None, include_bg=False):
    """logits: (N, C, *spatial) float; target: same shape, any real dtype."""
    assert logits.shape == target.shape, "'input' and 'target' must match"
    n, c = logits.shape[0], logits.shape[1]
    m = 1
    for d in logits.shape[2:]:
        m *= d

    # Free reshapes only (row-major contiguous) — no HBM transpose/copy.
    x = logits.reshape(n, c, m)
    t = target.reshape(n, c, m)            # keep native dtype; cast in-kernel

    pad = (-m) % _LANES
    if pad:
        # Only materializes a copy when the spatial size is not lane-aligned.
        # Logits pad with a large negative value so sigmoid(pad) == 0 exactly;
        # targets pad with 0 — padded columns contribute nothing to the sums.
        x = jnp.pad(x, ((0, 0), (0, 0), (0, pad)), constant_values=-1e9)
        t = jnp.pad(t, ((0, 0), (0, 0), (0, pad)))
    n_rows = (m + pad) // _LANES
    x = x.reshape(n, c, n_rows, _LANES)
    t = t.reshape(n, c, n_rows, _LANES)

    itemsize = max(x.dtype.itemsize, t.dtype.itemsize)
    block_rows = _choose_block_rows(n_rows, c, itemsize)
    if block_rows % 8 == 0:
        racc, groups = 8, block_rows // 8
    else:
        racc, groups = block_rows, 1
    mask_rows = (n_rows % block_rows) != 0

    inter_n, sp_n, st_n = _per_batch_channel_sums(
        x, t, block_rows, racc, groups, n_rows, mask_rows)

    # Combine per-batch partial sums (dice is nonlinear: combine sums, not dice).
    inter = jnp.sum(inter_n, axis=0)
    denom = jnp.sum(sp_n, axis=0) + jnp.sum(st_n, axis=0)
    if weight is not None:
        inter = weight * inter
    dice = 2.0 * inter / jnp.maximum(denom, EPSILON)
    if include_bg:
        return 1.0 - jnp.mean(dice)
    return 1.0 - jnp.mean(dice[1:])


def _reference_dice_loss(logits, target, *, weight=None, include_bg=False):
    """Pure-JAX reference mirroring the PyTorch module exactly."""
    c = logits.shape[1]
    p = jax.nn.sigmoid(logits / SIGMOID_TAU)
    p = jnp.moveaxis(p, 1, 0).reshape(c, -1)
    t = jnp.moveaxis(target.astype(jnp.float32), 1, 0).reshape(c, -1)
    inter = jnp.sum(p * t, axis=-1)
    if weight is not None:
        inter = weight * inter
    denom = jnp.sum(p * p, axis=-1) + jnp.sum(t * t, axis=-1)
    dice = 2.0 * inter / jnp.maximum(denom, EPSILON)
    if include_bg:
        return 1.0 - jnp.mean(dice)
    return 1.0 - jnp.mean(dice[1:])


if __name__ == "__main__":
    key = jax.random.PRNGKey(0)
    k1, k2, k3, k4 = jax.random.split(key, 4)

    # Test 1: canonical small NCHW with float32 binary target (matches the
    # PyTorch module's typical usage).
    N, C, H, W = 2, 4, 16, 16
    logits = jax.random.normal(k1, (N, C, H, W), dtype=jnp.float32)
    target = (jax.random.uniform(k2, (N, C, H, W)) > 0.5).astype(jnp.float32)

    loss = jax.block_until_ready(dice_loss(logits, target))
    ref = jax.block_until_ready(_reference_dice_loss(logits, target))
    assert jnp.allclose(loss, ref, rtol=1e-5, atol=1e-5), (loss, ref)

    # Test 2: non-lane-aligned spatial size (exercises the pad + row-mask
    # paths) and a narrow bf16 target stream (cast to f32 in-kernel).
    N2, C2, H2, W2 = 1, 3, 20, 73
    logits2 = jax.random.normal(k3, (N2, C2, H2, W2), dtype=jnp.float32)
    target2 = (jax.random.uniform(k4, (N2, C2, H2, W2)) > 0.5).astype(jnp.bfloat16)

    loss2 = jax.block_until_ready(dice_loss(logits2, target2))
    ref2 = jax.block_until_ready(_reference_dice_loss(logits2, target2))
    assert jnp.allclose(loss2, ref2, rtol=1e-5, atol=1e-5), (loss2, ref2)

    print("KERNEL_OK")
</pallas_src>

<mosaic_0001>
module attributes {stable_mosaic.version = 11 : i64} {
  func.func @_dice_sums_kernel(%arg0: i32, %arg1: i32, %arg2: memref<1x4x2x128xf32, #tpu.memory_space<vmem>>, %arg3: memref<1x4x2x128xf32, #tpu.memory_space<vmem>>, %arg4: memref<1x4x1xf32, #tpu.memory_space<vmem>>, %arg5: memref<1x4x1xf32, #tpu.memory_space<vmem>>, %arg6: memref<1x4x1xf32, #tpu.memory_space<vmem>>, %arg7: memref<4x2x128xf32, #tpu.memory_space<vmem>>, %arg8: memref<4x2x128xf32, #tpu.memory_space<vmem>>, %arg9: memref<4x2x128xf32, #tpu.memory_space<vmem>>) attributes {dimension_semantics = [#tpu.dimension_semantics<parallel>, #tpu.dimension_semantics<arbitrary>], iteration_bounds = array<i64: 2, 1>, scalar_prefetch = 0 : i64, scratch_operands = 3 : i64, tpu.core_type = #tpu.core_type<tc>, window_params = [{transform_indices = @transform_0, window_bounds = array<i64: 1, 4, 2, 128>}, {transform_indices = @transform_1, window_bounds = array<i64: 1, 4, 2, 128>}, {transform_indices = @transform_2, window_bounds = array<i64: 1, 4, 1>}, {transform_indices = @transform_3, window_bounds = array<i64: 1, 4, 1>}, {transform_indices = @transform_4, window_bounds = array<i64: 1, 4, 1>}]} {
    %c0_i32 = arith.constant 0 : i32
    %0 = arith.cmpi eq, %arg1, %c0_i32 : i32
    %1 = arith.extui %0 : i1 to i32
    %c0_i32_0 = arith.constant 0 : i32
    %2 = arith.cmpi ne, %1, %c0_i32_0 : i32
    scf.if %2 {
      %cst_29 = arith.constant 0.000000e+00 : f32
      %29 = vector.broadcast %cst_29 : f32 to vector<4x2x128xf32>
      %c0_30 = arith.constant 0 : index
      %c0_31 = arith.constant 0 : index
      %c0_32 = arith.constant 0 : index
      %30 = vector.load %arg7[%c0_30, %c0_31, %c0_32] : memref<4x2x128xf32, #tpu.memory_space<vmem>>, vector<4x2x128xf32>
      tpu.vector_store %arg7[%c0_30, %c0_31, %c0_32], %29 {strides = array<i32>} : memref<4x2x128xf32, #tpu.memory_space<vmem>>, vector<4x2x128xf32>,
      %cst_33 = arith.constant 0.000000e+00 : f32
      %31 = vector.broadcast %cst_33 : f32 to vector<4x2x128xf32>
      %c0_34 = arith.constant 0 : index
      %c0_35 = arith.constant 0 : index
      %c0_36 = arith.constant 0 : index
      %32 = vector.load %arg8[%c0_34, %c0_35, %c0_36] : memref<4x2x128xf32, #tpu.memory_space<vmem>>, vector<4x2x128xf32>
      tpu.vector_store %arg8[%c0_34, %c0_35, %c0_36], %31 {strides = array<i32>} : memref<4x2x128xf32, #tpu.memory_space<vmem>>, vector<4x2x128xf32>,
      %cst_37 = arith.constant 0.000000e+00 : f32
      %33 = vector.broadcast %cst_37 : f32 to vector<4x2x128xf32>
      %c0_38 = arith.constant 0 : index
      %c0_39 = arith.constant 0 : index
      %c0_40 = arith.constant 0 : index
      %34 = vector.load %arg9[%c0_38, %c0_39, %c0_40] : memref<4x2x128xf32, #tpu.memory_space<vmem>>, vector<4x2x128xf32>
      tpu.vector_store %arg9[%c0_38, %c0_39, %c0_40], %33 {strides = array<i32>} : memref<4x2x128xf32, #tpu.memory_space<vmem>>, vector<4x2x128xf32>,
    } else {
    }
    %c0 = arith.constant 0 : index
    %c0_1 = arith.constant 0 : index
    %c0_2 = arith.constant 0 : index
    %c0_3 = arith.constant 0 : index
    %3 = vector.load %arg2[%c0, %c0_1, %c0_2, %c0_3] : memref<1x4x2x128xf32, #tpu.memory_space<vmem>>, vector<1x4x2x128xf32>
    %4 = vector.shape_cast %3 : vector<1x4x2x128xf32> to vector<4x2x128xf32>
    %c0_4 = arith.constant 0 : index
    %c0_5 = arith.constant 0 : index
    %c0_6 = arith.constant 0 : index
    %c0_7 = arith.constant 0 : index
    %5 = vector.load %arg3[%c0_4, %c0_5, %c0_6, %c0_7] : memref<1x4x2x128xf32, #tpu.memory_space<vmem>>, vector<1x4x2x128xf32>
    %6 = vector.shape_cast %5 : vector<1x4x2x128xf32> to vector<4x2x128xf32>
    %cst = arith.constant 3.33333325 : f32
    %7 = vector.broadcast %cst : f32 to vector<4x2x128xf32>
    %8 = arith.mulf %4, %7 : vector<4x2x128xf32>
    %9 = arith.negf %8 : vector<4x2x128xf32>
    %10 = math.exp %9 : vector<4x2x128xf32>
    %cst_8 = arith.constant 1.000000e+00 : f32
    %11 = vector.broadcast %cst_8 : f32 to vector<4x2x128xf32>
    %12 = arith.addf %11, %10 : vector<4x2x128xf32>
    %13 = arith.divf %11, %12 : vector<4x2x128xf32>
    %14 = arith.mulf %13, %6 : vector<4x2x128xf32>
    %c0_9 = arith.constant 0 : index
    %c0_10 = arith.constant 0 : index
    %c0_11 = arith.constant 0 : index
    %15 = vector.load %arg7[%c0_9, %c0_10, %c0_11] : memref<4x2x128xf32, #tpu.memory_space<vmem>>, vector<4x2x128xf32>
    %16 = arith.addf %15, %14 : vector<4x2x128xf32>
    %c0_12 = arith.constant 0 : index
    %c0_13 = arith.constant 0 : index
    %c0_14 = arith.constant 0 : index
    %17 = vector.load %arg7[%c0_12, %c0_13, %c0_14] : memref<4x2x128xf32, #tpu.memory_space<vmem>>, vector<4x2x128xf32>
    tpu.vector_store %arg7[%c0_12, %c0_13, %c0_14], %16 {strides = array<i32>} : memref<4x2x128xf32, #tpu.memory_space<vmem>>, vector<4x2x128xf32>,
    %18 = arith.mulf %13, %13 : vector<4x2x128xf32>
    %c0_15 = arith.constant 0 : index
    %c0_16 = arith.constant 0 : index
    %c0_17 = arith.constant 0 : index
    %19 = vector.load %arg8[%c0_15, %c0_16, %c0_17] : memref<4x2x128xf32, #tpu.memory_space<vmem>>, vector<4x2x128xf32>
    %20 = arith.addf %19, %18 : vector<4x2x128xf32>
    %c0_18 = arith.constant 0 : index
    %c0_19 = arith.constant 0 : index
    %c0_20 = arith.constant 0 : index
    %21 = vector.load %arg8[%c0_18, %c0_19, %c0_20] : memref<4x2x128xf32, #tpu.memory_space<vmem>>, vector<4x2x128xf32>
    tpu.vector_store %arg8[%c0_18, %c0_19, %c0_20], %20 {strides = array<i32>} : memref<4x2x128xf32, #tpu.memory_space<vmem>>, vector<4x2x128xf32>,
    %22 = arith.mulf %6, %6 : vector<4x2x128xf32>
    %c0_21 = arith.constant 0 : index
    %c0_22 = arith.constant 0 : index
    %c0_23 = arith.constant 0 : index
    %23 = vector.load %arg9[%c0_21, %c0_22, %c0_23] : memref<4x2x128xf32, #tpu.memory_space<vmem>>, vector<4x2x128xf32>
    %24 = arith.addf %23, %22 : vector<4x2x128xf32>
    %c0_24 = arith.constant 0 : index
    %c0_25 = arith.constant 0 : index
    %c0_26 = arith.constant 0 : index
    %25 = vector.load %arg9[%c0_24, %c0_25, %c0_26] : memref<4x2x128xf32, #tpu.memory_space<vmem>>, vector<4x2x128xf32>
    tpu.vector_store %arg9[%c0_24, %c0_25, %c0_26], %24 {strides = array<i32>} : memref<4x2x128xf32, #tpu.memory_space<vmem>>, vector<4x2x128xf32>,
    %c0_i32_27 = arith.constant 0 : i32
    %26 = arith.cmpi eq, %arg1, %c0_i32_27 : i32
    %27 = arith.extui %26 : i1 to i32
    %c0_i32_28 = arith.constant 0 : i32
    %28 = arith.cmpi ne, %27, %c0_i32_28 : i32
    scf.if %28 {
      %c0_29 = arith.constant 0 : index
      %c0_30 = arith.constant 0 : index
      %c0_31 = arith.constant 0 : index
      %29 = vector.load %arg7[%c0_29, %c0_30, %c0_31] : memref<4x2x128xf32, #tpu.memory_space<vmem>>, vector<4x2x128xf32>
      %cst_32 = arith.constant dense<0.000000e+00> : vector<4x128xf32>
      %30 = vector.multi_reduction <add>, %29, %cst_32 [1] : vector<4x2x128xf32> to vector<4x128xf32>
      %cst_33 = arith.constant dense<0.000000e+00> : vector<4xf32>
      %31 = vector.multi_reduction <add>, %30, %cst_33 [1] : vector<4x128xf32> to vector<4xf32>
      %32 = vector.shape_cast %31 : vector<4xf32> to vector<4x1xf32>
      %33 = vector.shape_cast %32 : vector<4x1xf32> to vector<1x4x1xf32>
      %c0_34 = arith.constant 0 : index
      %c0_35 = arith.constant 0 : index
      %c0_36 = arith.constant 0 : index
      %34 = vector.load %arg4[%c0_34, %c0_35, %c0_36] : memref<1x4x1xf32, #tpu.memory_space<vmem>>, vector<1x4x1xf32>
      tpu.vector_store %arg4[%c0_34, %c0_35, %c0_36], %33 {strides = array<i32>} : memref<1x4x1xf32, #tpu.memory_space<vmem>>, vector<1x4x1xf32>,
      %c0_37 = arith.constant 0 : index
      %c0_38 = arith.constant 0 : index
      %c0_39 = arith.constant 0 : index
      %35 = vector.load %arg8[%c0_37, %c0_38, %c0_39] : memref<4x2x128xf32, #tpu.memory_space<vmem>>, vector<4x2x128xf32>
      %cst_40 = arith.constant dense<0.000000e+00> : vector<4x128xf32>
      %36 = vector.multi_reduction <add>, %35, %cst_40 [1] : vector<4x2x128xf32> to vector<4x128xf32>
      %cst_41 = arith.constant dense<0.000000e+00> : vector<4xf32>
      %37 = vector.multi_reduction <add>, %36, %cst_41 [1] : vector<4x128xf32> to vector<4xf32>
      %38 = vector.shape_cast %37 : vector<4xf32> to vector<4x1xf32>
      %39 = vector.shape_cast %38 : vector<4x1xf32> to vector<1x4x1xf32>
      %c0_42 = arith.constant 0 : index
      %c0_43 = arith.constant 0 : index
      %c0_44 = arith.constant 0 : index
      %40 = vector.load %arg5[%c0_42, %c0_43, %c0_44] : memref<1x4x1xf32, #tpu.memory_space<vmem>>, vector<1x4x1xf32>
      tpu.vector_store %arg5[%c0_42, %c0_43, %c0_44], %39 {strides = array<i32>} : memref<1x4x1xf32, #tpu.memory_space<vmem>>, vector<1x4x1xf32>,
      %c0_45 = arith.constant 0 : index
      %c0_46 = arith.constant 0 : index
      %c0_47 = arith.constant 0 : index
      %41 = vector.load %arg9[%c0_45, %c0_46, %c0_47] : memref<4x2x128xf32, #tpu.memory_space<vmem>>, vector<4x2x128xf32>
      %cst_48 = arith.constant dense<0.000000e+00> : vector<4x128xf32>
      %42 = vector.multi_reduction <add>, %41, %cst_48 [1] : vector<4x2x128xf32> to vector<4x128xf32>
      %cst_49 = arith.constant dense<0.000000e+00> : vector<4xf32>
      %43 = vector.multi_reduction <add>, %42, %cst_49 [1] : vector<4x128xf32> to vector<4xf32>
      %44 = vector.shape_cast %43 : vector<4xf32> to vector<4x1xf32>
      %45 = vector.shape_cast %44 : vector<4x1xf32> to vector<1x4x1xf32>
      %c0_50 = arith.constant 0 : index
      %c0_51 = arith.constant 0 : index
      %c0_52 = arith.constant 0 : index
      %46 = vector.load %arg6[%c0_50, %c0_51, %c0_52] : memref<1x4x1xf32, #tpu.memory_space<vmem>>, vector<1x4x1xf32>
      tpu.vector_store %arg6[%c0_50, %c0_51, %c0_52], %45 {strides = array<i32>} : memref<1x4x1xf32, #tpu.memory_space<vmem>>, vector<1x4x1xf32>,
    } else {
    }
    return
  }
  func.func @transform_0(%arg0: i32, %arg1: i32) -> (i32, i32, i32, i32) {
    %c0_i32 = arith.constant 0 : i32
    %c0_i32_0 = arith.constant 0 : i32
    %c0_i32_1 = arith.constant 0 : i32
    return %arg0, %c0_i32, %arg1, %c0_i32_0 : i32, i32, i32, i32
  }
  func.func @transform_1(%arg0: i32, %arg1: i32) -> (i32, i32, i32, i32) {
    %c0_i32 = arith.constant 0 : i32
    %c0_i32_0 = arith.constant 0 : i32
    %c0_i32_1 = arith.constant 0 : i32
    return %arg0, %c0_i32, %arg1, %c0_i32_0 : i32, i32, i32, i32
  }
  func.func @transform_2(%arg0: i32, %arg1: i32) -> (i32, i32, i32) {
    %c0_i32 = arith.constant 0 : i32
    %c0_i32_0 = arith.constant 0 : i32
    %c0_i32_1 = arith.constant 0 : i32
    return %arg0, %c0_i32, %c0_i32_0 : i32, i32, i32
  }
  func.func @transform_3(%arg0: i32, %arg1: i32) -> (i32, i32, i32) {
    %c0_i32 = arith.constant 0 : i32
    %c0_i32_0 = arith.constant 0 : i32
    %c0_i32_1 = arith.constant 0 : i32
    return %arg0, %c0_i32, %c0_i32_0 : i32, i32, i32
  }
  func.func @transform_4(%arg0: i32, %arg1: i32) -> (i32, i32, i32) {
    %c0_i32 = arith.constant 0 : i32
    %c0_i32_0 = arith.constant 0 : i32
    %c0_i32_1 = arith.constant 0 : i32
    return %arg0, %c0_i32, %c0_i32_0 : i32, i32, i32
  }
}

</mosaic_0001>

<llo_original>
// kernel: tpu_custom_call.1
$region0: #{tpu_custom_call.1}
  #allocation0 [shape = 'u32[]', space=smem, size = 0x4, offset = 0x4, fixed_abs, tag = 'smem constant byte address 0x4 - core index']
  #allocation1 [shape = 'u32[144,128]{1,0:T(1,128)}', space=vmem, size = 0x12000, scoped, tag = 'internal scratch']
  #allocation2 [shape = 'f32[4,2,128]{2,1,0:T(2,128)}', space=vmem, size = 0x1000, scoped, tag = 'scratch operand']
  #allocation3 [shape = 'f32[4,2,128]{2,1,0:T(2,128)}', space=vmem, size = 0x1000, scoped, tag = 'scratch operand']
  #allocation4 [shape = 'f32[4,2,128]{2,1,0:T(2,128)}', space=vmem, size = 0x1000, scoped, tag = 'scratch operand']
  %s0 = inlined_call_operand.hbm [shape: f32[2,4,2,128], index: 0, kind: input, shape index: {}]
  %s1 = inlined_call_operand.hbm [shape: f32[2,4,2,128], index: 1, kind: input, shape index: {}]
  %s2 = inlined_call_operand.vmem [shape: f32[2,4,1], index: 2, kind: output, shape index: {0}]
  %s3 = inlined_call_operand.vmem [shape: f32[2,4,1], index: 3, kind: output, shape index: {1}]
  %s4 = inlined_call_operand.vmem [shape: f32[2,4,1], index: 4, kind: output, shape index: {2}]
  %5 = xla_tuple %s2, %s3, %s4
  %s6 = sld [smem:[#allocation0]]
  $region73: #{tpu_custom_call.1} parent=0
    _
  %s8 = ssub.s32 1, %s6
  %s9 = scalar_select 0, %s8, %s6
  $region1: #{tpu_custom_call.1} parent=0
    #allocation5 [shape = 'u8[8192]{0}', space=vmem, size = 0x2000, scoped, tag = 'input window, operand 0']
    #allocation6 [shape = 's32[2]{0}', space=sflag, size = 0x8, scoped, tag = 'scoped memory for tpu_custom_call.1']
    #allocation7 [shape = 'u8[8192]{0}', space=vmem, size = 0x2000, scoped, tag = 'input window, operand 1']
    #allocation8 [shape = 's32[2]{0}', space=sflag, size = 0x8, scoped, tag = 'scoped memory for tpu_custom_call.1']
    %10 = vsyncpa [#allocation6], 0
    %s11 = scalar_lea.sflag [#allocation6], 1
    %12 = vsyncpa %s11, 0
    %13 = vsyncpa [#allocation8], 0
    %s14 = scalar_lea.sflag [#allocation8], 1
    %15 = vsyncpa %s14, 0
    loop: start=0, step=1, limit=4
    $region2: #{tpu_custom_call.1} parent=1 // loop_pre_header
      _
    $region3: #{tpu_custom_call.1} parent=1 // loop_header
      %s17 = sphi 0, %s21
      %p18 = scmp.ge.s32.totalorder %s17, 4
      %s24 = sphi 0, %s36
      %s25 = sphi 0, %s32
      %s26 = sphi 0, %s24
      %s27 = sphi 0, %s25
      %s28 = sphi 0, %s26
      %s29 = sphi 0, %s27
      %s41 = sphi 0, %s43
      %s44 = sphi 0, %s41
      %s45 = sphi 0, %s44
      %s61 = sphi 0, %s45
      %s69 = sphi 0, %s71
      %s72 = sphi 0, %s69
      %s73 = sphi 0, %s72
      %s89 = sphi 0, %s73
      %s95 = sphi 0, %s97
      %s98 = sphi 0, %s95
      %s99 = sphi 0, %s98
      %s115 = sphi 0, %s99
      %s121 = sphi 0, %s123
      %s124 = sphi 0, %s121
      %s125 = sphi 0, %s124
      %s141 = sphi 0, %s125
      %s147 = sphi 0, %s149
      %s150 = sphi 0, %s147
      %s151 = sphi 0, %s150
      %s167 = sphi 0, %s151
    $region4: #{tpu_custom_call.1} parent=1 // loop_header_branch
      %20 = sbr.rel (%p18) target = $region8
    $region5: #{tpu_custom_call.1} parent=1 // loop_body
      %s22 = ssub.s32 %s17, 1
      %s23 = ssub.s32 %s17, 2
      %s30 = sadd.s32 1, %s25
      %p31 = scmp.ge.s32.totalorder %s30, 1
      %s32 = scalar_select %p31, 0, %s30
      %s33 = sadd.s32 1, %s24
      %s34 = scalar_select %p31, %s33, %s24
      %p35 = scmp.ge.s32.totalorder %s34, 2
      %s36 = scalar_select %p35, 0, %s34
      %s37 = ssub.s32 %s24, %s36
      %s38 = ssub.s32 %s25, %s32
      %s39 = sor.u32 %s37, %s38
      %p40 = scmp.eq.s32.totalorder %s39, 0
      %s42 = sadd.s32 %s41, 1
      %s43 = scalar_select %p40, %s41, %s42
      %p46 = pneg %p40
      %p47 = scmp.eq.s32.totalorder %s17, 1
      %p48 = por %p46, %p47
      %p49 = scmp.ne.s32.totalorder %s41, %s44
      %p50 = scmp.eq.s32.totalorder %s17, 0
      %p51 = por %p49, %p50
      %p52 = scmp.ne.s32.totalorder %s41, %s44
      %p53 = scmp.eq.s32.totalorder %s22, 1
      %p54 = por %p52, %p53
      %p55 = scmp.ne.s32.totalorder %s44, %s45
      %p56 = scmp.eq.s32.totalorder %s22, 0
      %p57 = por %p55, %p56
      %p58 = scmp.ne.s32.totalorder %s44, %s45
      %p59 = scmp.eq.s32.totalorder %s23, 1
      %p60 = por %p58, %p59
      %p62 = scmp.ne.s32.totalorder %s45, %s61
      %p63 = scmp.eq.s32.totalorder %s23, 0
      %p64 = por %p62, %p63
      %s65 = ssub.s32 %s24, %s36
      %s66 = ssub.s32 %s25, %s32
      %s67 = sor.u32 %s65, %s66
      %p68 = scmp.eq.s32.totalorder %s67, 0
      %s70 = sadd.s32 %s69, 1
      %s71 = scalar_select %p68, %s69, %s70
      %p74 = pneg %p68
      %p75 = scmp.eq.s32.totalorder %s17, 1
      %p76 = por %p74, %p75
      %p77 = scmp.ne.s32.totalorder %s69, %s72
      %p78 = scmp.eq.s32.totalorder %s17, 0
      %p79 = por %p77, %p78
      %p80 = scmp.ne.s32.totalorder %s69, %s72
      %p81 = scmp.eq.s32.totalorder %s22, 1
      %p82 = por %p80, %p81
      %p83 = scmp.ne.s32.totalorder %s72, %s73
      %p84 = scmp.eq.s32.totalorder %s22, 0
      %p85 = por %p83, %p84
      %p86 = scmp.ne.s32.totalorder %s72, %s73
      %p87 = scmp.eq.s32.totalorder %s23, 1
      %p88 = por %p86, %p87
      %p90 = scmp.ne.s32.totalorder %s73, %s89
      %p91 = scmp.eq.s32.totalorder %s23, 0
      %p92 = por %p90, %p91
      %s93 = ssub.s32 %s24, %s36
      %p94 = scmp.eq.s32.totalorder %s93, 0
      %s96 = sadd.s32 %s95, 1
      %s97 = scalar_select %p94, %s95, %s96
      %p100 = pneg %p94
      %p101 = scmp.eq.s32.totalorder %s17, 1
      %p102 = por %p100, %p101
      %p103 = scmp.ne.s32.totalorder %s95, %s98
      %p104 = scmp.eq.s32.totalorder %s17, 0
      %p105 = por %p103, %p104
      %p106 = scmp.ne.s32.totalorder %s95, %s98
      %p107 = scmp.eq.s32.totalorder %s22, 1
      %p108 = por %p106, %p107
      %p109 = scmp.ne.s32.totalorder %s98, %s99
      %p110 = scmp.eq.s32.totalorder %s22, 0
      %p111 = por %p109, %p110
      %p112 = scmp.ne.s32.totalorder %s98, %s99
      %p113 = scmp.eq.s32.totalorder %s23, 1
      %p114 = por %p112, %p113
      %p116 = scmp.ne.s32.totalorder %s99, %s115
      %p117 = scmp.eq.s32.totalorder %s23, 0
      %p118 = por %p116, %p117
      %s119 = ssub.s32 %s24, %s36
      %p120 = scmp.eq.s32.totalorder %s119, 0
      %s122 = sadd.s32 %s121, 1
      %s123 = scalar_select %p120, %s121, %s122
      %p126 = pneg %p120
      %p127 = scmp.eq.s32.totalorder %s17, 1
      %p128 = por %p126, %p127
      %p129 = scmp.ne.s32.totalorder %s121, %s124
      %p130 = scmp.eq.s32.totalorder %s17, 0
      %p131 = por %p129, %p130
      %p132 = scmp.ne.s32.totalorder %s121, %s124
      %p133 = scmp.eq.s32.totalorder %s22, 1
      %p134 = por %p132, %p133
      %p135 = scmp.ne.s32.totalorder %s124, %s125
      %p136 = scmp.eq.s32.totalorder %s22, 0
      %p137 = por %p135, %p136
      %p138 = scmp.ne.s32.totalorder %s124, %s125
      %p139 = scmp.eq.s32.totalorder %s23, 1
      %p140 = por %p138, %p139
      %p142 = scmp.ne.s32.totalorder %s125, %s141
      %p143 = scmp.eq.s32.totalorder %s23, 0
      %p144 = por %p142, %p143
      %s145 = ssub.s32 %s24, %s36
      %p146 = scmp.eq.s32.totalorder %s145, 0
      %s148 = sadd.s32 %s147, 1
      %s149 = scalar_select %p146, %s147, %s148
      %p152 = pneg %p146
      %p153 = scmp.eq.s32.totalorder %s17, 1
      %p154 = por %p152, %p153
      %p155 = scmp.ne.s32.totalorder %s147, %s150
      %p156 = scmp.eq.s32.totalorder %s17, 0
      %p157 = por %p155, %p156
      %p158 = scmp.ne.s32.totalorder %s147, %s150
      %p159 = scmp.eq.s32.totalorder %s22, 1
      %p160 = por %p158, %p159
      %p161 = scmp.ne.s32.totalorder %s150, %s151
      %p162 = scmp.eq.s32.totalorder %s22, 0
      %p163 = por %p161, %p162
      %p164 = scmp.ne.s32.totalorder %s150, %s151
      %p165 = scmp.eq.s32.totalorder %s23, 1
      %p166 = por %p164, %p165
      %p168 = scmp.ne.s32.totalorder %s151, %s167
      %p169 = scmp.eq.s32.totalorder %s23, 0
      %p170 = por %p168, %p169
      %p171 = scmp.le.s32.totalorder 1, %s17
      %p172 = scmp.lt.s32.totalorder %s17, 3
      %p173 = pnand %p171, %p172
      %p174 = pneg %p173
      // Predicated region
      $region9: #{tpu_custom_call.1} parent=5 // pred_check
        _
      $region10: #{tpu_custom_call.1} parent=5 // pred_check_branch
        %176 = sbr.rel (%p173) target = $region12
      $region11: #{tpu_custom_call.1} parent=5 // pred_region
        %s177 = ssub.s32 %s17, 1
      $region12: #{tpu_custom_call.1} parent=5 // pred_fallthru
        _
      %p178 = scmp.lt.s32.totalorder %s17, 2
      // Predicated region
      $region13: #{tpu_custom_call.1} parent=5 // pred_check
        %p179 = pneg %p178
      $region14: #{tpu_custom_call.1} parent=5 // pred_check_branch
        %181 = sbr.rel (%p179) target = $region16
      $region15: #{tpu_custom_call.1} parent=5 // pred_region
        // Predicated region
        $region17: #{tpu_custom_call.1} parent=15 // pred_check
          %p182 = pneg %p51
        $region18: #{tpu_custom_call.1} parent=15 // pred_check_branch
          %184 = sbr.rel (%p182) target = $region20
        $region19: #{tpu_custom_call.1} parent=15 // pred_region
          %s185 = sand.u32 %s41, 1
          %s186 = scalar_lea.sflag [#allocation6], %s185
          %s187 = sand.u32 %s41, 1
          %s188 = smul.addr %s187, 8
          %s189 = scalar_lea.vmem [#allocation5], %s188
          %s191 = ssub.s32 128, 128
          %192 = vsyncadd %s186, %s191
          %s193 = smul.addr %s24, 4
          %s194 = sadd.s32 %s25, %s193
          %s195 = smul.addr %s194, 32
          %s196 = scalar_lea.hbm %s0, %s195
          %s197 = sshll.u32 %s189, 4
          %s198 = int_to_ptr.vmem [resolvable:$true] %s197
          %203 = dma.hbm_to_vmem [thread:$0]  %s196, 128, %s198, %s186, 32, 32, 2
        $region20: #{tpu_custom_call.1} parent=15 // pred_fallthru
          _
        // Predicated region
        $region21: #{tpu_custom_call.1} parent=15 // pred_check
          %p204 = pneg %p79
        $region22: #{tpu_custom_call.1} parent=15 // pred_check_branch
          %206 = sbr.rel (%p204) target = $region24
        $region23: #{tpu_custom_call.1} parent=15 // pred_region
          %s207 = sand.u32 %s69, 1
          %s208 = scalar_lea.sflag [#allocation8], %s207
          %s209 = sand.u32 %s69, 1
          %s210 = smul.addr %s209, 8
          %s211 = scalar_lea.vmem [#allocation7], %s210
          %s213 = ssub.s32 128, 128
          %214 = vsyncadd %s208, %s213
          %s215 = smul.addr %s24, 4
          %s216 = sadd.s32 %s25, %s215
          %s217 = smul.addr %s216, 32
          %s218 = scalar_lea.hbm %s1, %s217
          %s219 = sshll.u32 %s211, 4
          %s220 = int_to_ptr.vmem [resolvable:$true] %s219
          %225 = dma.hbm_to_vmem [thread:$0]  %s218, 128, %s220, %s208, 32, 32, 2
        $region24: #{tpu_custom_call.1} parent=15 // pred_fallthru
          _
      $region16: #{tpu_custom_call.1} parent=5 // pred_fallthru
        _
      %p226 = scmp.le.s32.totalorder 1, %s17
      %p227 = scmp.lt.s32.totalorder %s17, 3
      %p228 = pnand %p226, %p227
      %p229 = pneg %p228
      // Predicated region
      $region25: #{tpu_custom_call.1} parent=5 // pred_check
        _
      $region26: #{tpu_custom_call.1} parent=5 // pred_check_branch
        %231 = sbr.rel (%p228) target = $region28
      $region27: #{tpu_custom_call.1} parent=5 // pred_region
        %s232 = ssub.s32 %s17, 1
        %s233 = sand.u32 %s44, 1
        %s234 = scalar_lea.sflag [#allocation6], %s233
        %s235 = sand.u32 %s44, 1
        %s236 = smul.addr %s235, 8
        %s237 = scalar_lea.vmem [#allocation5], %s236
        // Predicated region
        $region29: #{tpu_custom_call.1} parent=27 // pred_check
          %p238 = pneg %p57
        $region30: #{tpu_custom_call.1} parent=27 // pred_check_branch
          %240 = sbr.rel (%p238) target = $region32
        $region31: #{tpu_custom_call.1} parent=27 // pred_region
          %241 = dma.done %s234, 128
        $region32: #{tpu_custom_call.1} parent=27 // pred_fallthru
          _
        %s242 = sand.u32 %s72, 1
        %s243 = scalar_lea.sflag [#allocation8], %s242
        %s244 = sand.u32 %s72, 1
        %s245 = smul.addr %s244, 8
        %s246 = scalar_lea.vmem [#allocation7], %s245
        // Predicated region
        $region33: #{tpu_custom_call.1} parent=27 // pred_check
          %p247 = pneg %p85
        $region34: #{tpu_custom_call.1} parent=27 // pred_check_branch
          %249 = sbr.rel (%p247) target = $region36
        $region35: #{tpu_custom_call.1} parent=27 // pred_region
          %250 = dma.done %s243, 128
        $region36: #{tpu_custom_call.1} parent=27 // pred_fallthru
          _
        %s251 = sand.u32 %s44, 1
        %s252 = scalar_lea.sflag [#allocation6], %s251
        %s253 = sand.u32 %s44, 1
        %s254 = smul.addr %s253, 8
        %s255 = scalar_lea.vmem [#allocation5], %s254
        %p256 = pneg %p57
        %p257 = pneg %p54
        %s258 = sand.u32 %s72, 1
        %s259 = scalar_lea.sflag [#allocation8], %s258
        %s260 = sand.u32 %s72, 1
        %s261 = smul.addr %s260, 8
        %s262 = scalar_lea.vmem [#allocation7], %s261
        %p263 = pneg %p85
        %p264 = pneg %p82
        %p265 = pneg %p111
        %p266 = pneg %p108
        %p267 = scmp.lt.s32.totalorder %s26, 1
        %s268 = scalar_select %p267, %s26, 1
        %s269 = smul.addr %s268, 4
        %s270 = scalar_lea.vmem %s2, %s269
        %p271 = pneg %p137
        %p272 = pneg %p134
        %p273 = scmp.lt.s32.totalorder %s26, 1
        %s274 = scalar_select %p273, %s26, 1
        %s275 = smul.addr %s274, 4
        %s276 = scalar_lea.vmem %s3, %s275
        %p277 = pneg %p163
        %p278 = pneg %p160
        %p279 = scmp.lt.s32.totalorder %s26, 1
        %s280 = scalar_select %p279, %s26, 1
        %s281 = smul.addr %s280, 4
        %s282 = scalar_lea.vmem %s4, %s281
        %p283 = scmp.lt.s32.totalorder %s26, 1
        %s284 = scalar_select %p283, %s26, 1
        %s285 = smul.addr %s284, 4
        %s286 = scalar_lea.vmem %s2, %s285
        %p287 = scmp.lt.s32.totalorder %s26, 1
        %s288 = scalar_select %p287, %s26, 1
        %s289 = smul.addr %s288, 4
        %s290 = scalar_lea.vmem %s3, %s289
        %p291 = scmp.lt.s32.totalorder %s26, 1
        %s292 = scalar_select %p291, %s26, 1
        %s293 = smul.addr %s292, 4
        %s294 = scalar_lea.vmem %s4, %s293
        %p295 = scmp.eq.s32.totalorder %s27, 0
        // Predicated region
        $region37: #{tpu_custom_call.1} parent=27 // pred_check
          %p296 = pneg %p295
        $region38: #{tpu_custom_call.1} parent=27 // pred_check_branch
          %298 = sbr.rel (%p296) target = $region40
        $region39: #{tpu_custom_call.1} parent=27 // pred_region
          %299 = vst [vmem:[#allocation2] sm:$0x3] 0.0
          %300 = vst [vmem:[#allocation2 + $0x2] sm:$0x3] 0.0
          %301 = vst [vmem:[#allocation2 + $0x4] sm:$0x3] 0.0
          %302 = vst [vmem:[#allocation2 + $0x6] sm:$0x3] 0.0
          %303 = vst [vmem:[#allocation3] sm:$0x3] 0.0
          %304 = vst [vmem:[#allocation3 + $0x2] sm:$0x3] 0.0
          %305 = vst [vmem:[#allocation3 + $0x4] sm:$0x3] 0.0
          %306 = vst [vmem:[#allocation3 + $0x6] sm:$0x3] 0.0
          %307 = vst [vmem:[#allocation4] sm:$0x3] 0.0
          %308 = vst [vmem:[#allocation4 + $0x2] sm:$0x3] 0.0
          %309 = vst [vmem:[#allocation4 + $0x4] sm:$0x3] 0.0
          %310 = vst [vmem:[#allocation4 + $0x6] sm:$0x3] 0.0
        $region40: #{tpu_custom_call.1} parent=27 // pred_fallthru
          _
        %v311 = vld [vmem:[%s237] sm:$0x3]
        %v312 = vld [vmem:[%s237 + $0x2] sm:$0x3]
        %v313 = vld [vmem:[%s237 + $0x4] sm:$0x3]
        %v314 = vld [vmem:[%s237 + $0x6] sm:$0x3]
        %v315 = vld [vmem:[%s246] sm:$0x3]
        %v316 = vld [vmem:[%s246 + $0x2] sm:$0x3]
        %v317 = vld [vmem:[%s246 + $0x4] sm:$0x3]
        %v318 = vld [vmem:[%s246 + $0x6] sm:$0x3]
        %v319 = vmul.f32 %v311, 3.3333333
        %v320 = vmul.f32 %v312, 3.3333333
        %v321 = vmul.f32 %v313, 3.3333333
        %v322 = vmul.f32 %v314, 3.3333333
        %v323 = vxor.u32 %v319, 2147483648
        %v324 = vxor.u32 %v320, 2147483648
        %v325 = vxor.u32 %v321, 2147483648
        %v326 = vxor.u32 %v322, 2147483648
        %v327 = vmul.f32 %v323, 1.442695
        %v328 = vpow.pop %v327
        %v329 = vmul.f32 %v324, 1.442695
        %v330 = vpow.pop %v329
        %v331 = vmul.f32 %v325, 1.442695
        %v332 = vpow.pop %v331
        %v333 = vmul.f32 %v326, 1.442695
        %v334 = vpow.pop %v333
        %v335 = vadd.f32 %v328, 1.0
        %v336 = vadd.f32 %v330, 1.0
        %v337 = vadd.f32 %v332, 1.0
        %v338 = vadd.f32 %v334, 1.0
        %v339 = vrcp.pop %v335
        %v340 = vmul.f32 1.0, %v339
        %v341 = vrcp.pop %v336
        %v342 = vmul.f32 1.0, %v341
        %v343 = vrcp.pop %v337
        %v344 = vmul.f32 1.0, %v343
        %v345 = vrcp.pop %v338
        %v346 = vmul.f32 1.0, %v345
        %v347 = vmul.f32 %v340, %v315
        %v348 = vmul.f32 %v342, %v316
        %v349 = vmul.f32 %v344, %v317
        %v350 = vmul.f32 %v346, %v318
        %v351 = vld [vmem:[#allocation2] sm:$0x3]
        %v352 = vld [vmem:[#allocation2 + $0x2] sm:$0x3]
        %v353 = vld [vmem:[#allocation2 + $0x4] sm:$0x3]
        %v354 = vld [vmem:[#allocation2 + $0x6] sm:$0x3]
        %v355 = vadd.f32 %v351, %v347
        %v356 = vadd.f32 %v352, %v348
        %v357 = vadd.f32 %v353, %v349
        %v358 = vadd.f32 %v354, %v350
        %359 = vst [vmem:[#allocation2] sm:$0x3] %v355
        %360 = vst [vmem:[#allocation2 + $0x2] sm:$0x3] %v356
        %361 = vst [vmem:[#allocation2 + $0x4] sm:$0x3] %v357
        %362 = vst [vmem:[#allocation2 + $0x6] sm:$0x3] %v358
        %v363 = vmul.f32 %v340, %v340
        %v364 = vmul.f32 %v342, %v342
        %v365 = vmul.f32 %v344, %v344
        %v366 = vmul.f32 %v346, %v346
        %v367 = vld [vmem:[#allocation3] sm:$0x3]
        %v368 = vld [vmem:[#allocation3 + $0x2] sm:$0x3]
        %v369 = vld [vmem:[#allocation3 + $0x4] sm:$0x3]
        %v370 = vld [vmem:[#allocation3 + $0x6] sm:$0x3]
        %v371 = vadd.f32 %v367, %v363
        %v372 = vadd.f32 %v368, %v364
        %v373 = vadd.f32 %v369, %v365
        %v374 = vadd.f32 %v370, %v366
        %375 = vst [vmem:[#allocation3] sm:$0x3] %v371
        %376 = vst [vmem:[#allocation3 + $0x2] sm:$0x3] %v372
        %377 = vst [vmem:[#allocation3 + $0x4] sm:$0x3] %v373
        %378 = vst [vmem:[#allocation3 + $0x6] sm:$0x3] %v374
        %v379 = vmul.f32 %v315, %v315
        %v380 = vmul.f32 %v316, %v316
        %v381 = vmul.f32 %v317, %v317
        %v382 = vmul.f32 %v318, %v318
        %v383 = vld [vmem:[#allocation4] sm:$0x3]
        %v384 = vld [vmem:[#allocation4 + $0x2] sm:$0x3]
        %v385 = vld [vmem:[#allocation4 + $0x4] sm:$0x3]
        %v386 = vld [vmem:[#allocation4 + $0x6] sm:$0x3]
        %v387 = vadd.f32 %v383, %v379
        %v388 = vadd.f32 %v384, %v380
        %v389 = vadd.f32 %v385, %v381
        %v390 = vadd.f32 %v386, %v382
        %391 = vst [vmem:[#allocation4] sm:$0x3] %v387
        %392 = vst [vmem:[#allocation4 + $0x2] sm:$0x3] %v388
        %393 = vst [vmem:[#allocation4 + $0x4] sm:$0x3] %v389
        %394 = vst [vmem:[#allocation4 + $0x6] sm:$0x3] %v390
        // Predicated region
        $region41: #{tpu_custom_call.1} parent=27 // pred_check
          %p395 = pneg %p295
        $region42: #{tpu_custom_call.1} parent=27 // pred_check_branch
          %397 = sbr.rel (%p395) target = $region44
        $region43: #{tpu_custom_call.1} parent=27 // pred_region
          %v398 = vld [vmem:[#allocation2] sm:$0x3]
          %v399 = vld [vmem:[#allocation2 + $0x2] sm:$0x3]
          %v400 = vld [vmem:[#allocation2 + $0x4] sm:$0x3]
          %v401 = vld [vmem:[#allocation2 + $0x6] sm:$0x3]
          %vm402 = vcmask 1041408
          %v403 = vsel %vm402, %v398, 0.0
          %v404 = vrot.slane %v403, 4
          %v405 = vadd.f32 %v403, %v404
          %v406 = vrot.slane %v405, 2
          %v407 = vadd.f32 %v405, %v406
          %v408 = vrot.slane %v407, 1
          %v409 = vadd.f32 %v407, %v408
          %v410 = vsel %vm402, %v399, 0.0
          %v411 = vrot.slane %v410, 4
          %v412 = vadd.f32 %v410, %v411
          %v413 = vrot.slane %v412, 2
          %v414 = vadd.f32 %v412, %v413
          %v415 = vrot.slane %v414, 1
          %v416 = vadd.f32 %v414, %v415
          %v417 = vsel %vm402, %v400, 0.0
          %v418 = vrot.slane %v417, 4
          %v419 = vadd.f32 %v417, %v418
          %v420 = vrot.slane %v419, 2
          %v421 = vadd.f32 %v419, %v420
          %v422 = vrot.slane %v421, 1
          %v423 = vadd.f32 %v421, %v422
          %v424 = vsel %vm402, %v401, 0.0
          %v425 = vrot.slane %v424, 4
          %v426 = vadd.f32 %v424, %v425
          %v427 = vrot.slane %v426, 2
          %v428 = vadd.f32 %v426, %v427
          %v429 = vrot.slane %v428, 1
          %v430 = vadd.f32 %v428, %v429
          %vm435 = vcmask 1041409
          %v436 = vsel %vm435, %v416, %v409
          %vm437 = vcmask 1042434
          %v438 = vsel %vm437, %v423, %v436
          %vm439 = vcmask 1043459
          %v440 = vsel %vm439, %v430, %v438
          %vm442 = vcmask 1043456
          %v443 = vsel %vm442, %v440, 0.0
          %444 = vadd.xlane.f32.xlu0 %v443
          %v445 = vpop.xlane.xlu0 %444
          %vm446 = vcmask 3072
          %447 = vst.msk [vmem:[%s286] sm:$0xf] %vm446, %v445
          %v448 = vld [vmem:[#allocation3] sm:$0x3]
          %v449 = vld [vmem:[#allocation3 + $0x2] sm:$0x3]
          %v450 = vld [vmem:[#allocation3 + $0x4] sm:$0x3]
          %v451 = vld [vmem:[#allocation3 + $0x6] sm:$0x3]
          %v452 = vsel %vm402, %v448, 0.0
          %v453 = vrot.slane %v452, 4
          %v454 = vadd.f32 %v452, %v453
          %v455 = vrot.slane %v454, 2
          %v456 = vadd.f32 %v454, %v455
          %v457 = vrot.slane %v456, 1
          %v458 = vadd.f32 %v456, %v457
          %v459 = vsel %vm402, %v449, 0.0
          %v460 = vrot.slane %v459, 4
          %v461 = vadd.f32 %v459, %v460
          %v462 = vrot.slane %v461, 2
          %v463 = vadd.f32 %v461, %v462
          %v464 = vrot.slane %v463, 1
          %v465 = vadd.f32 %v463, %v464
          %v466 = vsel %vm402, %v450, 0.0
          %v467 = vrot.slane %v466, 4
          %v468 = vadd.f32 %v466, %v467
          %v469 = vrot.slane %v468, 2
          %v470 = vadd.f32 %v468, %v469
          %v471 = vrot.slane %v470, 1
          %v472 = vadd.f32 %v470, %v471
          %v473 = vsel %vm402, %v451, 0.0
          %v474 = vrot.slane %v473, 4
          %v475 = vadd.f32 %v473, %v474
          %v476 = vrot.slane %v475, 2
          %v477 = vadd.f32 %v475, %v476
          %v478 = vrot.slane %v477, 1
          %v479 = vadd.f32 %v477, %v478
          %v484 = vsel %vm435, %v465, %v458
          %v485 = vsel %vm437, %v472, %v484
          %v486 = vsel %vm439, %v479, %v485
          %v488 = vsel %vm442, %v486, 0.0
          %489 = vadd.xlane.f32.xlu0 %v488
          %v490 = vpop.xlane.xlu0 %489
          %491 = vst.msk [vmem:[%s290] sm:$0xf] %vm446, %v490
          %v492 = vld [vmem:[#allocation4] sm:$0x3]
          %v493 = vld [vmem:[#allocation4 + $0x2] sm:$0x3]
          %v494 = vld [vmem:[#allocation4 + $0x4] sm:$0x3]
          %v495 = vld [vmem:[#allocation4 + $0x6] sm:$0x3]
          %v496 = vsel %vm402, %v492, 0.0
          %v497 = vrot.slane %v496, 4
          %v498 = vadd.f32 %v496, %v497
          %v499 = vrot.slane %v498, 2
          %v500 = vadd.f32 %v498, %v499
          %v501 = vrot.slane %v500, 1
          %v502 = vadd.f32 %v500, %v501
          %v503 = vsel %vm402, %v493, 0.0
          %v504 = vrot.slane %v503, 4
          %v505 = vadd.f32 %v503, %v504
          %v506 = vrot.slane %v505, 2
          %v507 = vadd.f32 %v505, %v506
          %v508 = vrot.slane %v507, 1
          %v509 = vadd.f32 %v507, %v508
          %v510 = vsel %vm402, %v494, 0.0
          %v511 = vrot.slane %v510, 4
          %v512 = vadd.f32 %v510, %v511
          %v513 = vrot.slane %v512, 2
          %v514 = vadd.f32 %v512, %v513
          %v515 = vrot.slane %v514, 1
          %v516 = vadd.f32 %v514, %v515
          %v517 = vsel %vm402, %v495, 0.0
          %v518 = vrot.slane %v517, 4
          %v519 = vadd.f32 %v517, %v518
          %v520 = vrot.slane %v519, 2
          %v521 = vadd.f32 %v519, %v520
          %v522 = vrot.slane %v521, 1
          %v523 = vadd.f32 %v521, %v522
          %v528 = vsel %vm435, %v509, %v502
          %v529 = vsel %vm437, %v516, %v528
          %v530 = vsel %vm439, %v523, %v529
          %v532 = vsel %vm442, %v530, 0.0
          %533 = vadd.xlane.f32.xlu0 %v532
          %v534 = vpop.xlane.xlu0 %533
          %535 = vst.msk [vmem:[%s294] sm:$0xf] %vm446, %v534
        $region44: #{tpu_custom_call.1} parent=27 // pred_fallthru
          _
        %p536 = scmp.lt.s32.totalorder %s26, 1
        %s537 = scalar_select %p536, %s26, 1
        %s538 = smul.addr %s537, 4
        %s539 = scalar_lea.vmem %s2, %s538
        %p540 = scmp.lt.s32.totalorder %s26, 1
        %s541 = scalar_select %p540, %s26, 1
        %s542 = smul.addr %s541, 4
        %s543 = scalar_lea.vmem %s3, %s542
        %p544 = scmp.lt.s32.totalorder %s26, 1
        %s545 = scalar_select %p544, %s26, 1
        %s546 = smul.addr %s545, 4
        %s547 = scalar_lea.vmem %s4, %s546
        // Predicated region
        $region45: #{tpu_custom_call.1} parent=27 // pred_check
          %p548 = pneg %p108
        $region46: #{tpu_custom_call.1} parent=27 // pred_check_branch
          %550 = sbr.rel (%p548) target = $region48
        $region47: #{tpu_custom_call.1} parent=27 // pred_region
          _
        $region48: #{tpu_custom_call.1} parent=27 // pred_fallthru
          _
        // Predicated region
        $region49: #{tpu_custom_call.1} parent=27 // pred_check
          %p551 = pneg %p134
        $region50: #{tpu_custom_call.1} parent=27 // pred_check_branch
          %553 = sbr.rel (%p551) target = $region52
        $region51: #{tpu_custom_call.1} parent=27 // pred_region
          _
        $region52: #{tpu_custom_call.1} parent=27 // pred_fallthru
          _
        // Predicated region
        $region53: #{tpu_custom_call.1} parent=27 // pred_check
          %p554 = pneg %p160
        $region54: #{tpu_custom_call.1} parent=27 // pred_check_branch
          %556 = sbr.rel (%p554) target = $region56
        $region55: #{tpu_custom_call.1} parent=27 // pred_region
          _
        $region56: #{tpu_custom_call.1} parent=27 // pred_fallthru
          _
      $region28: #{tpu_custom_call.1} parent=5 // pred_fallthru
        _
      %p557 = scmp.le.s32.totalorder 2, %s17
      // Predicated region
      $region57: #{tpu_custom_call.1} parent=5 // pred_check
        %p558 = pneg %p557
      $region58: #{tpu_custom_call.1} parent=5 // pred_check_branch
        %560 = sbr.rel (%p558) target = $region60
      $region59: #{tpu_custom_call.1} parent=5 // pred_region
        %s561 = ssub.s32 %s17, 2
        // Predicated region
        $region61: #{tpu_custom_call.1} parent=59 // pred_check
          %p562 = pneg %p114
        $region62: #{tpu_custom_call.1} parent=59 // pred_check_branch
          %564 = sbr.rel (%p562) target = $region64
        $region63: #{tpu_custom_call.1} parent=59 // pred_region
          %p565 = scmp.lt.s32.totalorder %s28, 1
          %s566 = scalar_select %p565, %s28, 1
          %s567 = smul.addr %s566, 4
          %s568 = scalar_lea.vmem %s2, %s567
        $region64: #{tpu_custom_call.1} parent=59 // pred_fallthru
          _
        // Predicated region
        $region65: #{tpu_custom_call.1} parent=59 // pred_check
          %p569 = pneg %p140
        $region66: #{tpu_custom_call.1} parent=59 // pred_check_branch
          %571 = sbr.rel (%p569) target = $region68
        $region67: #{tpu_custom_call.1} parent=59 // pred_region
          %p572 = scmp.lt.s32.totalorder %s28, 1
          %s573 = scalar_select %p572, %s28, 1
          %s574 = smul.addr %s573, 4
          %s575 = scalar_lea.vmem %s3, %s574
        $region68: #{tpu_custom_call.1} parent=59 // pred_fallthru
          _
        // Predicated region
        $region69: #{tpu_custom_call.1} parent=59 // pred_check
          %p576 = pneg %p166
        $region70: #{tpu_custom_call.1} parent=59 // pred_check_branch
          %578 = sbr.rel (%p576) target = $region72
        $region71: #{tpu_custom_call.1} parent=59 // pred_region
          %p579 = scmp.lt.s32.totalorder %s28, 1
          %s580 = scalar_select %p579, %s28, 1
          %s581 = smul.addr %s580, 4
          %s582 = scalar_lea.vmem %s4, %s581
        $region72: #{tpu_custom_call.1} parent=59 // pred_fallthru
          _
      $region60: #{tpu_custom_call.1} parent=5 // pred_fallthru
        _
    $region6: #{tpu_custom_call.1} parent=1 // loop_footer
      %s21 = sadd.s32 1, %s17
    $region7: #{tpu_custom_call.1} parent=1 // loop_footer_branch
      %16 = sbr.rel target = $region3
    $region8: #{tpu_custom_call.1} parent=1 // loop_exit
      _
    %583 = vsyncpa [#allocation6], 1
    %s584 = scalar_lea.sflag [#allocation6], 1
    %585 = vsyncpa %s584, 1
    %586 = vsyncpa [#allocation8], 1
    %s587 = scalar_lea.sflag [#allocation8], 1
    %588 = vsyncpa %s587, 1

</llo_original>
